<compile_context>
chip_gen: v5e
topology: v5e:2x2
jax: 0.10.0
libtpu: 0.0.40
codegen_flags: <defaults>
</compile_context>

<pallas_src>
from functools import partial

import numpy as np
import jax
import jax.numpy as jnp
from jax import lax
from jax.experimental import pallas as pl
from jax.experimental.pallas import tpu as pltpu

LANES = 128  # hidden_size == 1 state is lane-replicated across one vreg row


def _make_kernel(batch, seq, time_lag, n_rows, inner_unroll):
    def kernel(scal_ref, u1_ref, oml_ref, out_ref):
        # ---- loop-invariant scalars, splatted ONCE (JAX does not CSE broadcasts) ----
        a_v = jnp.full((1, LANES), scal_ref[0], jnp.float32)    # 0.5 * oo1
        wh_v = jnp.full((1, LANES), scal_ref[1], jnp.float32)   # 0.5 * w_b1_yom
        bh_v = jnp.full((1, LANES), scal_ref[2], jnp.float32)   # 0.5 * b0_yom
        wa_v = jnp.full((1, LANES), scal_ref[3], jnp.float32)   # 0.25 * oo1 * w_b1_yom

        # rows b < time_lag (and unused lanes) stay zero
        out_ref[...] = jnp.zeros((batch, LANES), dtype=jnp.float32)

        def hot_step(c, z, u1_v, oml_v):
            """One recurrence step.  Carry invariant: z == wh*c + bh.
            Only the two ops following tanh are on the loop-carried critical
            path; all precomputes depend only on (c, per-step inputs) and
            overlap the EUP tanh latency."""
            p = oml_v  # placeholder to keep ordering readable (overwritten below)
            p = a_v * c                       # a*c      -> oo*c     = p + p*th
            q = wa_v * c                      # wh*a*c   -> wh*oo*c  = q + q*th
            base = oml_v * c + u1_v           # (1-ol)*c + u1
            base2 = wh_v * base + bh_v
            basep = base - p
            base2q = base2 - q
            th = jnp.tanh(z)                  # EUP; sigmoid via tanh identity
            c1 = basep - p * th               # = f*c + u1
            z1 = base2q - q * th              # = wh*c1 + bh (next tanh argument)
            return c1, z1, th, p

        def row_body(r, carry):
            c, z = carry
            s0 = r * seq

            # ---- hot inner loop over t = 0 .. seq-2: no stores, no mod, no branch ----
            def t_body(t, cz):
                c_t, z_t = cz
                s = s0 + t
                u1_v = jnp.full((1, LANES), u1_ref[s], jnp.float32)
                oml_v = jnp.full((1, LANES), oml_ref[s], jnp.float32)
                c1, z1, _, _ = hot_step(c_t, z_t, u1_v, oml_v)
                return (c1, z1)

            c, z = lax.fori_loop(0, seq - 1, t_body, (c, z), unroll=inner_unroll)

            # ---- cold per-row epilogue: last time step t = seq-1 + packed store ----
            # (PyTorch overwrites row b every t, so only the last t survives.)
            s_last = s0 + (seq - 1)
            u1_v = jnp.full((1, LANES), u1_ref[s_last], jnp.float32)
            oml_v = jnp.full((1, LANES), oml_ref[s_last], jnp.float32)
            c1, z1, th, p = hot_step(c, z, u1_v, oml_v)

            oo = a_v + a_v * th               # oo1*sigmoid(b0_yom + c*w_b1_yom)
            ol_v = 1.0 - oml_v
            h0 = p + p * th                   # oo*c   (h_n = oo*c + bp, bp == 0)
            l0 = ol_v * c
            f = oml_v - oo                    # 1 - oo - ol

            # lane-pack [h, c, l, oo, ol, f...] -> one (1,128) vst per row; masks
            # built here (cold path) so nothing is pinned across the hot loop.
            lane = lax.broadcasted_iota(jnp.int32, (1, LANES), 1)
            row = jnp.where(lane == 0, h0,
                  jnp.where(lane == 1, c,
                  jnp.where(lane == 2, l0,
                  jnp.where(lane == 3, oo,
                  jnp.where(lane == 4, ol_v, f)))))
            out_ref[pl.ds(time_lag + r, 1), :] = row

            return (c1, z1)

        c0 = jnp.zeros((1, LANES), jnp.float32)
        z0 = bh_v                             # z = wh*c + bh with c == 0
        lax.fori_loop(0, n_rows, row_body, (c0, z0))

    return kernel


@partial(jax.jit, static_argnames=("time_lag", "spin_len", "train_len"))
def mcpbrnn_forward(params, x, y_obs, *, time_lag, spin_len, train_len):
    """params: (7,) = [w_r_yom, w_r_ylm, w_r_yfm, b0_yom, w_b1_yom, b0_ylm, w_b2_ylm]
       x: (batch, seq, input_size>=2) [batch_first], y_obs: (batch, 1)."""
    params = params.astype(jnp.float32)
    x = x.astype(jnp.float32)
    y_obs = y_obs.astype(jnp.float32)
    batch, seq, _ = x.shape
    assert batch > time_lag, "need at least one active batch row"
    assert train_len - spin_len >= 2, "unbiased std needs >= 2 samples"

    w_yom, w_ylm, w_yfm = params[0], params[1], params[2]
    b0_yom, w_b1, b0_ylm, w_b2 = params[3], params[4], params[5], params[6]

    # softmax split over the three r-weights (loop-invariant)
    e = jnp.exp(jnp.stack([w_yom, w_ylm, w_yfm]))
    den = jnp.sum(e)
    oo1 = e[0] / den
    ol1 = e[1] / den

    # obs_std = torch.std(y_obs[spinLen:traintimeLen]) (unbiased), in the wrapper
    obsstd = jnp.std(y_obs[spin_len:train_len], ddof=1)

    # input-only gate: pass (1 - ol) per step; ol is reconstructed only in the
    # cold per-row epilogue inside the kernel.
    n_rows = batch - time_lag
    u1_flat = x[time_lag:, :, 0].reshape(-1)
    u2_flat = x[time_lag:, :, 1].reshape(-1)
    oml_flat = (1.0 - ol1 * jax.nn.sigmoid(b0_ylm + u2_flat * w_b2)).astype(jnp.float32)

    # pre-halved scalars for the tanh form of oo1*sigmoid(.) plus the pre-folded
    # constant product wa = a*wh used by the shortened recurrence chain.
    a = 0.5 * oo1
    wh = 0.5 * w_b1
    bh = 0.5 * b0_yom
    scal = jnp.stack([a, wh, bh, a * wh]).astype(jnp.float32)

    # inner (hot) loop runs seq-1 steps; fully unroll small trip counts,
    # otherwise unroll by 8 (scan handles the remainder, no input padding).
    inner_trips = seq - 1
    if inner_trips <= 0:
        inner_unroll = 1
    elif inner_trips <= 16:
        inner_unroll = inner_trips
    else:
        inner_unroll = 8

    kernel = _make_kernel(batch, seq, time_lag, n_rows, inner_unroll)
    packed = pl.pallas_call(
        kernel,
        out_shape=jax.ShapeDtypeStruct((batch, LANES), jnp.float32),
        in_specs=[pl.BlockSpec(memory_space=pltpu.MemorySpace.SMEM)] * 3,
        out_specs=pl.BlockSpec(memory_space=pltpu.MemorySpace.VMEM),
    )(scal, u1_flat, oml_flat)

    # unpack lanes 0..5 -> per-row scalars
    h_n = packed[:, 0:1]
    c_n = packed[:, 1:2]
    l_n = packed[:, 2:3]
    g_oo = packed[:, 3:4]
    g_ol = packed[:, 4:5]
    g_f = packed[:, 5:6]

    # constant outputs built in the wrapper (no kernel stores / writeback)
    zeros = jnp.zeros((batch, 1), jnp.float32)
    bp_n = zeros                       # ib * g == 0
    g_ib = zeros                       # Gate_ib == 0
    active = (jnp.arange(batch)[:, None] >= time_lag).astype(jnp.float32)
    obs_std = active * obsstd
    h_nout = jnp.concatenate([h_n, obs_std], axis=1)

    return h_n, c_n, l_n, bp_n, g_ib, g_oo, g_ol, g_f, h_nout, obs_std


def _reference_numpy(params, x, y_obs, time_lag, spin_len, train_len):
    w_yom, w_ylm, w_yfm, b0_yom, w_b1, b0_ylm, w_b2 = [float(p) for p in params]
    batch, seq, _ = x.shape
    xs = np.transpose(np.asarray(x, np.float64), (1, 0, 2))  # time-major
    yo = np.asarray(y_obs, np.float64)
    obsstd = np.std(yo[spin_len:train_len], ddof=1)
    e = np.exp([w_yom, w_ylm, w_yfm])
    den = e.sum()
    oo1, ol1 = e[0] / den, e[1] / den
    keys = ["h", "c", "l", "bp", "gib", "goo", "gol", "gf", "std"]
    out = {k: np.zeros((batch, 1), np.float64) for k in keys}
    sig = lambda z: 1.0 / (1.0 + np.exp(-z))
    c = 0.0
    for b in range(time_lag, batch):
        for t in range(seq):
            u1, u2 = xs[t, b, 0], xs[t, b, 1]
            oo = oo1 * sig(b0_yom + c * w_b1)
            ol = ol1 * sig(b0_ylm + u2 * w_b2)
            f = 1.0 - oo - ol
            c1 = f * c + u1
            out["h"][b, 0] = oo * c
            out["c"][b, 0] = c
            out["l"][b, 0] = ol * c
            out["goo"][b, 0] = oo
            out["gol"][b, 0] = ol
            out["gf"][b, 0] = f
            out["std"][b, 0] = obsstd
            c = c1
    return out


if __name__ == "__main__":
    # small shapes consistent with the module: input_size=2, hidden_size=1
    batch, seq, ninp = 8, 8, 2
    time_lag, spin_len, train_len = 1, 1, 6

    key = jax.random.PRNGKey(0)
    kp, kx, ky = jax.random.split(key, 3)
    # torch.rand-style uniform [0,1) params:
    # [w_r_yom, w_r_ylm, w_r_yfm, b0_yom, w_b1_yom, b0_ylm, w_b2_ylm]
    params = jax.random.uniform(kp, (7,), dtype=jnp.float32)
    x = jax.random.uniform(kx, (batch, seq, ninp), dtype=jnp.float32)
    y_obs = jax.random.uniform(ky, (batch, 1), dtype=jnp.float32)

    outs = mcpbrnn_forward(params, x, y_obs, time_lag=time_lag,
                           spin_len=spin_len, train_len=train_len)
    outs = jax.block_until_ready(outs)
    h_n, c_n, l_n, bp_n, g_ib, g_oo, g_ol, g_f, h_nout, obs_std = outs

    ref = _reference_numpy(np.asarray(params), np.asarray(x), np.asarray(y_obs),
                           time_lag, spin_len, train_len)
    # tolerances account for f32 accumulation over the serial recurrence and the
    # hardware tanh/EUP approximation used for sigmoid inside the kernel.
    RTOL, ATOL = 1e-3, 1e-5
    np.testing.assert_allclose(np.asarray(h_n), ref["h"], rtol=RTOL, atol=ATOL)
    np.testing.assert_allclose(np.asarray(c_n), ref["c"], rtol=RTOL, atol=ATOL)
    np.testing.assert_allclose(np.asarray(l_n), ref["l"], rtol=RTOL, atol=ATOL)
    np.testing.assert_allclose(np.asarray(bp_n), ref["bp"], rtol=RTOL, atol=ATOL)
    np.testing.assert_allclose(np.asarray(g_ib), ref["gib"], rtol=RTOL, atol=ATOL)
    np.testing.assert_allclose(np.asarray(g_oo), ref["goo"], rtol=RTOL, atol=ATOL)
    np.testing.assert_allclose(np.asarray(g_ol), ref["gol"], rtol=RTOL, atol=ATOL)
    np.testing.assert_allclose(np.asarray(g_f), ref["gf"], rtol=RTOL, atol=ATOL)
    np.testing.assert_allclose(np.asarray(obs_std), ref["std"], rtol=RTOL, atol=ATOL)
    np.testing.assert_allclose(
        np.asarray(h_nout), np.concatenate([ref["h"], ref["std"]], axis=1),
        rtol=RTOL, atol=ATOL)

    print("KERNEL_OK")
</pallas_src>

<mosaic_0001>
module attributes {stable_mosaic.version = 11 : i64} {
  func.func @kernel(%arg0: memref<4xf32, #tpu.memory_space<smem>>, %arg1: memref<56xf32, #tpu.memory_space<smem>>, %arg2: memref<56xf32, #tpu.memory_space<smem>>, %arg3: memref<8x128xf32, #tpu.memory_space<vmem>>) attributes {dimension_semantics = [], scalar_prefetch = 0 : i64, scratch_operands = 0 : i64, tpu.core_type = #tpu.core_type<tc>} {
    %c0 = arith.constant 0 : index
    %0 = memref.load %arg0[%c0] : memref<4xf32, #tpu.memory_space<smem>>
    %1 = vector.broadcast %0 : f32 to vector<1x128xf32>
    %c1 = arith.constant 1 : index
    %2 = memref.load %arg0[%c1] : memref<4xf32, #tpu.memory_space<smem>>
    %3 = vector.broadcast %2 : f32 to vector<1x128xf32>
    %c2 = arith.constant 2 : index
    %4 = memref.load %arg0[%c2] : memref<4xf32, #tpu.memory_space<smem>>
    %5 = vector.broadcast %4 : f32 to vector<1x128xf32>
    %c3 = arith.constant 3 : index
    %6 = memref.load %arg0[%c3] : memref<4xf32, #tpu.memory_space<smem>>
    %7 = vector.broadcast %6 : f32 to vector<1x128xf32>
    %cst = arith.constant 0.000000e+00 : f32
    %8 = vector.broadcast %cst : f32 to vector<8x128xf32>
    %c0_0 = arith.constant 0 : index
    %c0_1 = arith.constant 0 : index
    %9 = vector.load %arg3[%c0_0, %c0_1] : memref<8x128xf32, #tpu.memory_space<vmem>>, vector<8x128xf32>
    tpu.vector_store %arg3[%c0_0, %c0_1], %8 {strides = array<i32>} : memref<8x128xf32, #tpu.memory_space<vmem>>, vector<8x128xf32>,
    %cst_2 = arith.constant 0.000000e+00 : f32
    %10 = vector.broadcast %cst_2 : f32 to vector<1x128xf32>
    %c0_i32 = arith.constant 0 : i32
    %c7_i32 = arith.constant 7 : i32
    %11 = arith.addi %c0_i32, %c7_i32 : i32
    %c1_i32 = arith.constant 1 : i32
    %12:2 = scf.for %arg4 = %c0_i32 to %11 step %c1_i32 iter_args(%arg5 = %10, %arg6 = %5) -> (vector<1x128xf32>, vector<1x128xf32>)  : i32 {
      %c8_i32 = arith.constant 8 : i32
      %13 = arith.muli %arg4, %c8_i32 : i32
      %c0_i32_4 = arith.constant 0 : i32
      %14 = arith.addi %13, %c0_i32_4 : i32
      %15 = arith.index_cast %14 : i32 to index
      %16 = memref.load %arg1[%15] : memref<56xf32, #tpu.memory_space<smem>>
      %17 = vector.broadcast %16 : f32 to vector<1x128xf32>
      %18 = arith.index_cast %14 : i32 to index
      %19 = memref.load %arg2[%18] : memref<56xf32, #tpu.memory_space<smem>>
      %20 = vector.broadcast %19 : f32 to vector<1x128xf32>
      %21 = arith.mulf %1, %arg5 : vector<1x128xf32>
      %22 = arith.mulf %7, %arg5 : vector<1x128xf32>
      %23 = arith.mulf %20, %arg5 : vector<1x128xf32>
      %24 = arith.addf %23, %17 : vector<1x128xf32>
      %25 = arith.mulf %3, %24 : vector<1x128xf32>
      %26 = arith.addf %25, %5 : vector<1x128xf32>
      %27 = arith.subf %24, %21 : vector<1x128xf32>
      %28 = arith.subf %26, %22 : vector<1x128xf32>
      %29 = math.tanh %arg6 : vector<1x128xf32>
      %30 = arith.mulf %21, %29 : vector<1x128xf32>
      %31 = arith.subf %27, %30 : vector<1x128xf32>
      %32 = arith.mulf %22, %29 : vector<1x128xf32>
      %33 = arith.subf %28, %32 : vector<1x128xf32>
      %c1_i32_5 = arith.constant 1 : i32
      %34 = arith.addi %13, %c1_i32_5 : i32
      %35 = arith.index_cast %34 : i32 to index
      %36 = memref.load %arg1[%35] : memref<56xf32, #tpu.memory_space<smem>>
      %37 = vector.broadcast %36 : f32 to vector<1x128xf32>
      %38 = arith.index_cast %34 : i32 to index
      %39 = memref.load %arg2[%38] : memref<56xf32, #tpu.memory_space<smem>>
      %40 = vector.broadcast %39 : f32 to vector<1x128xf32>
      %41 = arith.mulf %1, %31 : vector<1x128xf32>
      %42 = arith.mulf %7, %31 : vector<1x128xf32>
      %43 = arith.mulf %40, %31 : vector<1x128xf32>
      %44 = arith.addf %43, %37 : vector<1x128xf32>
      %45 = arith.mulf %3, %44 : vector<1x128xf32>
      %46 = arith.addf %45, %5 : vector<1x128xf32>
      %47 = arith.subf %44, %41 : vector<1x128xf32>
      %48 = arith.subf %46, %42 : vector<1x128xf32>
      %49 = math.tanh %33 : vector<1x128xf32>
      %50 = arith.mulf %41, %49 : vector<1x128xf32>
      %51 = arith.subf %47, %50 : vector<1x128xf32>
      %52 = arith.mulf %42, %49 : vector<1x128xf32>
      %53 = arith.subf %48, %52 : vector<1x128xf32>
      %c2_i32 = arith.constant 2 : i32
      %54 = arith.addi %13, %c2_i32 : i32
      %55 = arith.index_cast %54 : i32 to index
      %56 = memref.load %arg1[%55] : memref<56xf32, #tpu.memory_space<smem>>
      %57 = vector.broadcast %56 : f32 to vector<1x128xf32>
      %58 = arith.index_cast %54 : i32 to index
      %59 = memref.load %arg2[%58] : memref<56xf32, #tpu.memory_space<smem>>
      %60 = vector.broadcast %59 : f32 to vector<1x128xf32>
      %61 = arith.mulf %1, %51 : vector<1x128xf32>
      %62 = arith.mulf %7, %51 : vector<1x128xf32>
      %63 = arith.mulf %60, %51 : vector<1x128xf32>
      %64 = arith.addf %63, %57 : vector<1x128xf32>
      %65 = arith.mulf %3, %64 : vector<1x128xf32>
      %66 = arith.addf %65, %5 : vector<1x128xf32>
      %67 = arith.subf %64, %61 : vector<1x128xf32>
      %68 = arith.subf %66, %62 : vector<1x128xf32>
      %69 = math.tanh %53 : vector<1x128xf32>
      %70 = arith.mulf %61, %69 : vector<1x128xf32>
      %71 = arith.subf %67, %70 : vector<1x128xf32>
      %72 = arith.mulf %62, %69 : vector<1x128xf32>
      %73 = arith.subf %68, %72 : vector<1x128xf32>
      %c3_i32 = arith.constant 3 : i32
      %74 = arith.addi %13, %c3_i32 : i32
      %75 = arith.index_cast %74 : i32 to index
      %76 = memref.load %arg1[%75] : memref<56xf32, #tpu.memory_space<smem>>
      %77 = vector.broadcast %76 : f32 to vector<1x128xf32>
      %78 = arith.index_cast %74 : i32 to index
      %79 = memref.load %arg2[%78] : memref<56xf32, #tpu.memory_space<smem>>
      %80 = vector.broadcast %79 : f32 to vector<1x128xf32>
      %81 = arith.mulf %1, %71 : vector<1x128xf32>
      %82 = arith.mulf %7, %71 : vector<1x128xf32>
      %83 = arith.mulf %80, %71 : vector<1x128xf32>
      %84 = arith.addf %83, %77 : vector<1x128xf32>
      %85 = arith.mulf %3, %84 : vector<1x128xf32>
      %86 = arith.addf %85, %5 : vector<1x128xf32>
      %87 = arith.subf %84, %81 : vector<1x128xf32>
      %88 = arith.subf %86, %82 : vector<1x128xf32>
      %89 = math.tanh %73 : vector<1x128xf32>
      %90 = arith.mulf %81, %89 : vector<1x128xf32>
      %91 = arith.subf %87, %90 : vector<1x128xf32>
      %92 = arith.mulf %82, %89 : vector<1x128xf32>
      %93 = arith.subf %88, %92 : vector<1x128xf32>
      %c4_i32 = arith.constant 4 : i32
      %94 = arith.addi %13, %c4_i32 : i32
      %95 = arith.index_cast %94 : i32 to index
      %96 = memref.load %arg1[%95] : memref<56xf32, #tpu.memory_space<smem>>
      %97 = vector.broadcast %96 : f32 to vector<1x128xf32>
      %98 = arith.index_cast %94 : i32 to index
      %99 = memref.load %arg2[%98] : memref<56xf32, #tpu.memory_space<smem>>
      %100 = vector.broadcast %99 : f32 to vector<1x128xf32>
      %101 = arith.mulf %1, %91 : vector<1x128xf32>
      %102 = arith.mulf %7, %91 : vector<1x128xf32>
      %103 = arith.mulf %100, %91 : vector<1x128xf32>
      %104 = arith.addf %103, %97 : vector<1x128xf32>
      %105 = arith.mulf %3, %104 : vector<1x128xf32>
      %106 = arith.addf %105, %5 : vector<1x128xf32>
      %107 = arith.subf %104, %101 : vector<1x128xf32>
      %108 = arith.subf %106, %102 : vector<1x128xf32>
      %109 = math.tanh %93 : vector<1x128xf32>
      %110 = arith.mulf %101, %109 : vector<1x128xf32>
      %111 = arith.subf %107, %110 : vector<1x128xf32>
      %112 = arith.mulf %102, %109 : vector<1x128xf32>
      %113 = arith.subf %108, %112 : vector<1x128xf32>
      %c5_i32 = arith.constant 5 : i32
      %114 = arith.addi %13, %c5_i32 : i32
      %115 = arith.index_cast %114 : i32 to index
      %116 = memref.load %arg1[%115] : memref<56xf32, #tpu.memory_space<smem>>
      %117 = vector.broadcast %116 : f32 to vector<1x128xf32>
      %118 = arith.index_cast %114 : i32 to index
      %119 = memref.load %arg2[%118] : memref<56xf32, #tpu.memory_space<smem>>
      %120 = vector.broadcast %119 : f32 to vector<1x128xf32>
      %121 = arith.mulf %1, %111 : vector<1x128xf32>
      %122 = arith.mulf %7, %111 : vector<1x128xf32>
      %123 = arith.mulf %120, %111 : vector<1x128xf32>
      %124 = arith.addf %123, %117 : vector<1x128xf32>
      %125 = arith.mulf %3, %124 : vector<1x128xf32>
      %126 = arith.addf %125, %5 : vector<1x128xf32>
      %127 = arith.subf %124, %121 : vector<1x128xf32>
      %128 = arith.subf %126, %122 : vector<1x128xf32>
      %129 = math.tanh %113 : vector<1x128xf32>
      %130 = arith.mulf %121, %129 : vector<1x128xf32>
      %131 = arith.subf %127, %130 : vector<1x128xf32>
      %132 = arith.mulf %122, %129 : vector<1x128xf32>
      %133 = arith.subf %128, %132 : vector<1x128xf32>
      %c6_i32 = arith.constant 6 : i32
      %134 = arith.addi %13, %c6_i32 : i32
      %135 = arith.index_cast %134 : i32 to index
      %136 = memref.load %arg1[%135] : memref<56xf32, #tpu.memory_space<smem>>
      %137 = vector.broadcast %136 : f32 to vector<1x128xf32>
      %138 = arith.index_cast %134 : i32 to index
      %139 = memref.load %arg2[%138] : memref<56xf32, #tpu.memory_space<smem>>
      %140 = vector.broadcast %139 : f32 to vector<1x128xf32>
      %141 = arith.mulf %1, %131 : vector<1x128xf32>
      %142 = arith.mulf %7, %131 : vector<1x128xf32>
      %143 = arith.mulf %140, %131 : vector<1x128xf32>
      %144 = arith.addf %143, %137 : vector<1x128xf32>
      %145 = arith.mulf %3, %144 : vector<1x128xf32>
      %146 = arith.addf %145, %5 : vector<1x128xf32>
      %147 = arith.subf %144, %141 : vector<1x128xf32>
      %148 = arith.subf %146, %142 : vector<1x128xf32>
      %149 = math.tanh %133 : vector<1x128xf32>
      %150 = arith.mulf %141, %149 : vector<1x128xf32>
      %151 = arith.subf %147, %150 : vector<1x128xf32>
      %152 = arith.mulf %142, %149 : vector<1x128xf32>
      %153 = arith.subf %148, %152 : vector<1x128xf32>
      %c7_i32_6 = arith.constant 7 : i32
      %c7_i32_7 = arith.constant 7 : i32
      %154 = arith.addi %13, %c7_i32_7 : i32
      %155 = arith.index_cast %154 : i32 to index
      %156 = memref.load %arg1[%155] : memref<56xf32, #tpu.memory_space<smem>>
      %157 = vector.broadcast %156 : f32 to vector<1x128xf32>
      %158 = arith.index_cast %154 : i32 to index
      %159 = memref.load %arg2[%158] : memref<56xf32, #tpu.memory_space<smem>>
      %160 = vector.broadcast %159 : f32 to vector<1x128xf32>
      %161 = arith.mulf %1, %151 : vector<1x128xf32>
      %162 = arith.mulf %7, %151 : vector<1x128xf32>
      %163 = arith.mulf %160, %151 : vector<1x128xf32>
      %164 = arith.addf %163, %157 : vector<1x128xf32>
      %165 = arith.mulf %3, %164 : vector<1x128xf32>
      %166 = arith.addf %165, %5 : vector<1x128xf32>
      %167 = arith.subf %164, %161 : vector<1x128xf32>
      %168 = arith.subf %166, %162 : vector<1x128xf32>
      %169 = math.tanh %153 : vector<1x128xf32>
      %170 = arith.mulf %161, %169 : vector<1x128xf32>
      %171 = arith.subf %167, %170 : vector<1x128xf32>
      %172 = arith.mulf %162, %169 : vector<1x128xf32>
      %173 = arith.subf %168, %172 : vector<1x128xf32>
      %174 = arith.mulf %1, %169 : vector<1x128xf32>
      %175 = arith.addf %1, %174 : vector<1x128xf32>
      %cst_8 = arith.constant 1.000000e+00 : f32
      %176 = vector.broadcast %cst_8 : f32 to vector<1x128xf32>
      %177 = arith.subf %176, %160 : vector<1x128xf32>
      %178 = arith.mulf %161, %169 : vector<1x128xf32>
      %179 = arith.addf %161, %178 : vector<1x128xf32>
      %180 = arith.mulf %177, %151 : vector<1x128xf32>
      %181 = arith.subf %160, %175 : vector<1x128xf32>
      %182 = tpu.iota {dimensions = array<i32: 1>} : vector<1x128xi32>
      %c0_i32_9 = arith.constant 0 : i32
      %183 = vector.broadcast %c0_i32_9 : i32 to vector<1x128xi32>
      %184 = arith.cmpi eq, %182, %183 : vector<1x128xi32>
      %c1_i32_10 = arith.constant 1 : i32
      %185 = vector.broadcast %c1_i32_10 : i32 to vector<1x128xi32>
      %186 = arith.cmpi eq, %182, %185 : vector<1x128xi32>
      %c2_i32_11 = arith.constant 2 : i32
      %187 = vector.broadcast %c2_i32_11 : i32 to vector<1x128xi32>
      %188 = arith.cmpi eq, %182, %187 : vector<1x128xi32>
      %c3_i32_12 = arith.constant 3 : i32
      %189 = vector.broadcast %c3_i32_12 : i32 to vector<1x128xi32>
      %190 = arith.cmpi eq, %182, %189 : vector<1x128xi32>
      %c4_i32_13 = arith.constant 4 : i32
      %191 = vector.broadcast %c4_i32_13 : i32 to vector<1x128xi32>
      %192 = arith.cmpi eq, %182, %191 : vector<1x128xi32>
      %193 = arith.select %192, %177, %181 : vector<1x128xi1>, vector<1x128xf32>
      %194 = arith.select %190, %175, %193 : vector<1x128xi1>, vector<1x128xf32>
      %195 = arith.select %188, %180, %194 : vector<1x128xi1>, vector<1x128xf32>
      %196 = arith.select %186, %151, %195 : vector<1x128xi1>, vector<1x128xf32>
      %197 = arith.select %184, %179, %196 : vector<1x128xi1>, vector<1x128xf32>
      %c1_i32_14 = arith.constant 1 : i32
      %198 = arith.addi %c1_i32_14, %arg4 : i32
      %199 = arith.index_cast %198 : i32 to index
      %c0_15 = arith.constant 0 : index
      %200 = vector.load %arg3[%199, %c0_15] : memref<8x128xf32, #tpu.memory_space<vmem>>, vector<1x128xf32>
      tpu.vector_store %arg3[%199, %c0_15], %197 {strides = array<i32>} : memref<8x128xf32, #tpu.memory_space<vmem>>, vector<1x128xf32>,
      scf.yield %171, %173 : vector<1x128xf32>, vector<1x128xf32>
    }
    %c7_i32_3 = arith.constant 7 : i32
    return
  }
}

</mosaic_0001>

<llo_original>
// kernel: mcpbrnn_forward.1
$region0: #{mcpbrnn_forward.1}
  #allocation0 [shape = 'u32[]', space=smem, size = 0x4, offset = 0x4, fixed_abs, tag = 'smem constant byte address 0x4 - core index']
  #allocation1 [shape = 'u32[72,128]{1,0:T(1,128)}', space=vmem, size = 0x9000, scoped, tag = 'internal scratch']
  %s0 = inlined_call_operand.vmem [shape: f32[4], index: 0, kind: input, shape index: {}]
  %s1 = inlined_call_operand.vmem [shape: f32[56], index: 1, kind: input, shape index: {}]
  %s2 = inlined_call_operand.vmem [shape: f32[56], index: 2, kind: input, shape index: {}]
  %s3 = inlined_call_operand.vmem [shape: f32[8,128], index: 3, kind: output, shape index: {}]
  %s4 = sld [smem:[#allocation0]]
  $region41: #{mcpbrnn_forward.1} parent=0
    _
  %s6 = ssub.s32 1, %s4
  %s7 = scalar_select 0, %s6, %s4
  $region1: #{mcpbrnn_forward.1} parent=0
    #allocation2 [shape = 'u8[512]{0}', space=smem, size = 0x200, scoped, tag = 'input window, operand 0, single buffered']
    #allocation3 [shape = 's32[1]{0}', space=sflag, size = 0x4, scoped, tag = 'scoped memory for mcpbrnn_forward.1']
    #allocation4 [shape = 'u8[512]{0}', space=smem, size = 0x200, scoped, tag = 'input window, operand 1, single buffered']
    #allocation5 [shape = 's32[1]{0}', space=sflag, size = 0x4, scoped, tag = 'scoped memory for mcpbrnn_forward.1']
    #allocation6 [shape = 'u8[512]{0}', space=smem, size = 0x200, scoped, tag = 'input window, operand 2, single buffered']
    %8 = vsyncpa [#allocation3], 0
    %9 = vsyncpa [#allocation5], 0
    // Predicated region
    $region2: #{mcpbrnn_forward.1} parent=1 // pred_check
      _
    $region3: #{mcpbrnn_forward.1} parent=1 // pred_check_branch
      %11 = sbr.rel (0) target = $region5
    $region4: #{mcpbrnn_forward.1} parent=1 // pred_region
      %13 = vsyncadd [#allocation3], 0
      %s15 = sshll.u32 %s0, 4
      %s16 = int_to_ptr.vmem [resolvable:$true] %s15
      %18 = dma.vmem_to_smem %s16, 16, [#allocation2], [#allocation3]
    $region5: #{mcpbrnn_forward.1} parent=1 // pred_fallthru
      _
    // Predicated region
    $region6: #{mcpbrnn_forward.1} parent=1 // pred_check
      _
    $region7: #{mcpbrnn_forward.1} parent=1 // pred_check_branch
      %20 = sbr.rel (0) target = $region9
    $region8: #{mcpbrnn_forward.1} parent=1 // pred_region
      %22 = vsyncadd [#allocation5], 0
      %s24 = sshll.u32 %s1, 4
      %s25 = int_to_ptr.vmem [resolvable:$true] %s24
      %27 = dma.vmem_to_smem %s25, 16, [#allocation4], [#allocation5]
    $region9: #{mcpbrnn_forward.1} parent=1 // pred_fallthru
      _
    // Predicated region
    $region10: #{mcpbrnn_forward.1} parent=1 // pred_check
      _
    $region11: #{mcpbrnn_forward.1} parent=1 // pred_check_branch
      %29 = sbr.rel (0) target = $region13
    $region12: #{mcpbrnn_forward.1} parent=1 // pred_region
      %31 = vsyncadd [#allocation5], 0
      %s33 = sshll.u32 %s2, 4
      %s34 = int_to_ptr.vmem [resolvable:$true] %s33
      %36 = dma.vmem_to_smem %s34, 16, [#allocation6], [#allocation5]
    $region13: #{mcpbrnn_forward.1} parent=1 // pred_fallthru
      _
    // Predicated region
    $region14: #{mcpbrnn_forward.1} parent=1 // pred_check
      _
    $region15: #{mcpbrnn_forward.1} parent=1 // pred_check_branch
      %38 = sbr.rel (0) target = $region17
    $region16: #{mcpbrnn_forward.1} parent=1 // pred_region
      %40 = dma.done [#allocation3], 16
    $region17: #{mcpbrnn_forward.1} parent=1 // pred_fallthru
      _
    // Predicated region
    $region18: #{mcpbrnn_forward.1} parent=1 // pred_check
      _
    $region19: #{mcpbrnn_forward.1} parent=1 // pred_check_branch
      %42 = sbr.rel (0) target = $region21
    $region20: #{mcpbrnn_forward.1} parent=1 // pred_region
      %44 = dma.done [#allocation5], 16
    $region21: #{mcpbrnn_forward.1} parent=1 // pred_fallthru
      _
    // Predicated region
    $region22: #{mcpbrnn_forward.1} parent=1 // pred_check
      _
    $region23: #{mcpbrnn_forward.1} parent=1 // pred_check_branch
      %46 = sbr.rel (0) target = $region25
    $region24: #{mcpbrnn_forward.1} parent=1 // pred_region
      %48 = dma.done [#allocation5], 16
    $region25: #{mcpbrnn_forward.1} parent=1 // pred_fallthru
      _
    %49 = sfence
    %s50 = sld [smem:[#allocation2]]
    %v51 = vstv %s50
    %s52 = sld [smem:[#allocation2 + $0x1]]
    %v53 = vstv %s52
    %s54 = sld [smem:[#allocation2 + $0x2]]
    %v55 = vstv %s54
    %s56 = sld [smem:[#allocation2 + $0x3]]
    %v57 = vstv %s56
    %58 = vst [vmem:[%s3] sm:$0xff] 0.0
    loop: start=0, step=1, limit=7
    $region26: #{mcpbrnn_forward.1} parent=1 // loop_pre_header
      _
    $region27: #{mcpbrnn_forward.1} parent=1 // loop_header
      %s60 = sphi 0, %s64
      %p61 = scmp.ge.s32.totalorder %s60, 7
      %v65 = vphi 0.0, %v208
      %v66 = vphi %v55, %v210
    $region28: #{mcpbrnn_forward.1} parent=1 // loop_header_branch
      %63 = sbr.rel (%p61) target = $region32
    $region29: #{mcpbrnn_forward.1} parent=1 // loop_body
      %s67 = smul.u32 %s60, 8
      %s68 = sld [smem:[#allocation4 + %s67]]
      %v69 = vstv %s68
      %s70 = sld [smem:[#allocation6 + %s67]]
      %v71 = vstv %s70
      %v72 = vmul.f32 %v51, %v65
      %v73 = vmul.f32 %v57, %v65
      %v74 = vmul.f32 %v71, %v65
      %v75 = vadd.f32 %v74, %v69
      %v76 = vmul.f32 %v53, %v75
      %v77 = vadd.f32 %v76, %v55
      %v78 = vsub.f32 %v75, %v72
      %v79 = vsub.f32 %v77, %v73
      %v80 = vtanh.pop %v66
      %v81 = vmul.f32 %v72, %v80
      %v82 = vsub.f32 %v78, %v81
      %v83 = vmul.f32 %v73, %v80
      %v84 = vsub.f32 %v79, %v83
      %s85 = sadd.s32 %s67, 1
      %s86 = sld [smem:[#allocation4 + %s85]]
      %v87 = vstv %s86
      %s88 = sld [smem:[#allocation6 + %s85]]
      %v89 = vstv %s88
      %v90 = vmul.f32 %v51, %v82
      %v91 = vmul.f32 %v57, %v82
      %v92 = vmul.f32 %v89, %v82
      %v93 = vadd.f32 %v92, %v87
      %v94 = vmul.f32 %v53, %v93
      %v95 = vadd.f32 %v94, %v55
      %v96 = vsub.f32 %v93, %v90
      %v97 = vsub.f32 %v95, %v91
      %v98 = vtanh.pop %v84
      %v99 = vmul.f32 %v90, %v98
      %v100 = vsub.f32 %v96, %v99
      %v101 = vmul.f32 %v91, %v98
      %v102 = vsub.f32 %v97, %v101
      %s103 = sadd.s32 %s67, 2
      %s104 = sld [smem:[#allocation4 + %s103]]
      %v105 = vstv %s104
      %s106 = sld [smem:[#allocation6 + %s103]]
      %v107 = vstv %s106
      %v108 = vmul.f32 %v51, %v100
      %v109 = vmul.f32 %v57, %v100
      %v110 = vmul.f32 %v107, %v100
      %v111 = vadd.f32 %v110, %v105
      %v112 = vmul.f32 %v53, %v111
      %v113 = vadd.f32 %v112, %v55
      %v114 = vsub.f32 %v111, %v108
      %v115 = vsub.f32 %v113, %v109
      %v116 = vtanh.pop %v102
      %v117 = vmul.f32 %v108, %v116
      %v118 = vsub.f32 %v114, %v117
      %v119 = vmul.f32 %v109, %v116
      %v120 = vsub.f32 %v115, %v119
      %s121 = sadd.s32 %s67, 3
      %s122 = sld [smem:[#allocation4 + %s121]]
      %v123 = vstv %s122
      %s124 = sld [smem:[#allocation6 + %s121]]
      %v125 = vstv %s124
      %v126 = vmul.f32 %v51, %v118
      %v127 = vmul.f32 %v57, %v118
      %v128 = vmul.f32 %v125, %v118
      %v129 = vadd.f32 %v128, %v123
      %v130 = vmul.f32 %v53, %v129
      %v131 = vadd.f32 %v130, %v55
      %v132 = vsub.f32 %v129, %v126
      %v133 = vsub.f32 %v131, %v127
      %v134 = vtanh.pop %v120
      %v135 = vmul.f32 %v126, %v134
      %v136 = vsub.f32 %v132, %v135
      %v137 = vmul.f32 %v127, %v134
      %v138 = vsub.f32 %v133, %v137
      %s139 = sadd.s32 %s67, 4
      %s140 = sld [smem:[#allocation4 + %s139]]
      %v141 = vstv %s140
      %s142 = sld [smem:[#allocation6 + %s139]]
      %v143 = vstv %s142
      %v144 = vmul.f32 %v51, %v136
      %v145 = vmul.f32 %v57, %v136
      %v146 = vmul.f32 %v143, %v136
      %v147 = vadd.f32 %v146, %v141
      %v148 = vmul.f32 %v53, %v147
      %v149 = vadd.f32 %v148, %v55
      %v150 = vsub.f32 %v147, %v144
      %v151 = vsub.f32 %v149, %v145
      %v152 = vtanh.pop %v138
      %v153 = vmul.f32 %v144, %v152
      %v154 = vsub.f32 %v150, %v153
      %v155 = vmul.f32 %v145, %v152
      %v156 = vsub.f32 %v151, %v155
      %s157 = sadd.s32 %s67, 5
      %s158 = sld [smem:[#allocation4 + %s157]]
      %v159 = vstv %s158
      %s160 = sld [smem:[#allocation6 + %s157]]
      %v161 = vstv %s160
      %v162 = vmul.f32 %v51, %v154
      %v163 = vmul.f32 %v57, %v154
      %v164 = vmul.f32 %v161, %v154
      %v165 = vadd.f32 %v164, %v159
      %v166 = vmul.f32 %v53, %v165
      %v167 = vadd.f32 %v166, %v55
      %v168 = vsub.f32 %v165, %v162
      %v169 = vsub.f32 %v167, %v163
      %v170 = vtanh.pop %v156
      %v171 = vmul.f32 %v162, %v170
      %v172 = vsub.f32 %v168, %v171
      %v173 = vmul.f32 %v163, %v170
      %v174 = vsub.f32 %v169, %v173
      %s175 = sadd.s32 %s67, 6
      %s176 = sld [smem:[#allocation4 + %s175]]
      %v177 = vstv %s176
      %s178 = sld [smem:[#allocation6 + %s175]]
      %v179 = vstv %s178
      %v180 = vmul.f32 %v51, %v172
      %v181 = vmul.f32 %v57, %v172
      %v182 = vmul.f32 %v179, %v172
      %v183 = vadd.f32 %v182, %v177
      %v184 = vmul.f32 %v53, %v183
      %v185 = vadd.f32 %v184, %v55
      %v186 = vsub.f32 %v183, %v180
      %v187 = vsub.f32 %v185, %v181
      %v188 = vtanh.pop %v174
      %v189 = vmul.f32 %v180, %v188
      %v190 = vsub.f32 %v186, %v189
      %v191 = vmul.f32 %v181, %v188
      %v192 = vsub.f32 %v187, %v191
      %s193 = sadd.s32 %s67, 7
      %s194 = sld [smem:[#allocation4 + %s193]]
      %v195 = vstv %s194
      %s196 = sld [smem:[#allocation6 + %s193]]
      %v197 = vstv %s196
      %v198 = vmul.f32 %v51, %v190
      %v199 = vmul.f32 %v57, %v190
      %v200 = vmul.f32 %v197, %v190
      %v201 = vadd.f32 %v200, %v195
      %v202 = vmul.f32 %v53, %v201
      %v203 = vadd.f32 %v202, %v55
      %v204 = vsub.f32 %v201, %v198
      %v205 = vsub.f32 %v203, %v199
      %v206 = vtanh.pop %v192
      %v207 = vmul.f32 %v198, %v206
      %v208 = vsub.f32 %v204, %v207
      %v209 = vmul.f32 %v199, %v206
      %v210 = vsub.f32 %v205, %v209
      %v211 = vmul.f32 %v51, %v206
      %v212 = vadd.f32 %v51, %v211
      %v213 = vsub.f32 1.0, %v197
      %v214 = vadd.f32 %v198, %v207
      %v215 = vmul.f32 %v213, %v190
      %v216 = vsub.f32 %v197, %v212
      %v217 = vlaneseq
      %v218 = vand.u32 %v217, 127
      %vm219 = vcmp.eq.s32.totalorder %v218, 0
      %vm220 = vcmp.eq.s32.totalorder %v218, 1
      %vm221 = vcmp.eq.s32.totalorder %v218, 2
      %vm222 = vcmp.eq.s32.totalorder %v218, 3
      %vm223 = vcmp.eq.s32.totalorder %v218, 4
      %v224 = vsel %vm223, %v213, %v216
      %v225 = vsel %vm222, %v212, %v224
      %v226 = vsel %vm221, %v215, %v225
      %v227 = vsel %vm220, %v190, %v226
      %v228 = vsel %vm219, %v214, %v227
      %s229 = sadd.s32 %s60, 1
      %s230 = scalar_lea.vmem %s3, %s229
      %231 = vst [vmem:[%s230] sm:$0x1] %v228
    $region30: #{mcpbrnn_forward.1} parent=1 // loop_footer
      %s64 = sadd.s32 1, %s60
    $region31: #{mcpbrnn_forward.1} parent=1 // loop_footer_branch
      %59 = sbr.rel target = $region27
    $region32: #{mcpbrnn_forward.1} parent=1 // loop_exit
      _
    // Predicated region
    $region33: #{mcpbrnn_forward.1} parent=1 // pred_check
      _
    $region34: #{mcpbrnn_forward.1} parent=1 // pred_check_branch
      %233 = sbr.rel (0) target = $region36
    $region35: #{mcpbrnn_forward.1} parent=1 // pred_region
      _
    $region36: #{mcpbrnn_forward.1} parent=1 // pred_fallthru
      _
    // Predicated region
    $region37: #{mcpbrnn_forward.1} parent=1 // pred_check
      _
    $region38: #{mcpbrnn_forward.1} parent=1 // pred_check_branch
      %235 = sbr.rel (0) target = $region40
    $region39: #{mcpbrnn_forward.1} parent=1 // pred_region
      _
    $region40: #{mcpbrnn_forward.1} parent=1 // pred_fallthru
      _
    %236 = vsyncpa [#allocation3], 1
    %237 = vsyncpa [#allocation5], 1

</llo_original>
